<compile_context>
chip_gen: v7x
topology: tpu7x:2x2x1
jax: 0.10.0
libtpu: 0.0.40
codegen_flags: <defaults>
</compile_context>

<pallas_src>
import functools
import math

import jax
import jax.numpy as jnp
import numpy as np
from jax import lax
from jax.experimental import pallas as pl
from jax.experimental.pallas import tpu as pltpu


def _stat_model_kernel(ids_ref, table_ref, out_ref):
    """One grid step gathers a tile of TN ids from the fused table.

    ids_ref   : (TN, 1)      int32   — quant ids for this tile
    table_ref : (Q, 2*6D)    float32 — [raw_emb | activated_emb], VMEM-resident
    out_ref   : (TN, 2*6D)   float32 — gathered [x | activations]
    """
    ids = ids_ref[...]                              # (TN, 1) int32
    tn = ids.shape[0]
    q_levels = table_ref.shape[0]

    # Embedding lookup as a one-hot matmul (gather -> MXU).  Exact in f32:
    # each output element is a single 1.0 * table-entry product.
    iota = lax.broadcasted_iota(jnp.int32, (tn, q_levels), 1)
    onehot = (ids == iota).astype(table_ref.dtype)  # (TN, Q)
    out_ref[...] = jnp.dot(
        onehot, table_ref[...],
        preferred_element_type=jnp.float32).astype(out_ref.dtype)


def _round_up(x, m):
    return ((x + m - 1) // m) * m


def _num_tensorcores_per_chip():
    """Best-effort TC-per-chip count (perf heuristic only; safe fallback=1)."""
    try:
        kind = (getattr(jax.devices()[0], "device_kind", "") or "").lower()
        if ("v7" in kind) or ("v4" in kind) or ("v5p" in kind):
            return 2
    except Exception:
        pass
    return 1


@functools.partial(jax.jit, static_argnames=("latent_dim",))
def statistical_model_forward(quant_ids, emb_weight, *, latent_dim):
    """Pallas implementation of StatisticalModel.forward.

    quant_ids : int array of any shape (e.g. (B, T))
    emb_weight: (quant_levels, 6*latent_dim) float32 embedding table
    returns   : dict matching the PyTorch module's output dict
    """
    d = latent_dim
    emb_dim = 6 * latent_dim
    assert emb_weight.shape[1] == emb_dim
    fused_dim = 2 * emb_dim

    emb_weight = emb_weight.astype(jnp.float32)

    # Activation applied once to the (tiny) table; gather commutes with it.
    act_table = jnp.concatenate(
        [jax.nn.softplus(emb_weight[:, 0 * d:2 * d]),
         jax.nn.sigmoid(emb_weight[:, 2 * d:6 * d])], axis=1)
    fused_table = jnp.concatenate([emb_weight, act_table], axis=1)  # (Q, 2*6D)

    orig_shape = quant_ids.shape
    n = int(np.prod(orig_shape)) if orig_shape else 1

    # Tile sizing: large tiles to amortize per-step pipeline overhead; only
    # split work into >=2 steps when there are multiple TensorCores to feed.
    num_tc = _num_tensorcores_per_chip()
    if num_tc >= 2:
        tile_n = min(1024, _round_up(max(math.ceil(n / num_tc), 8), 8))
    else:
        tile_n = min(1024, _round_up(max(n, 8), 8))

    n_pad = _round_up(n, tile_n)
    steps = n_pad // tile_n
    if num_tc >= 2 and steps > 1 and steps % 2 != 0:
        # Keep the grid even so both v7x TensorCores get a balanced share.
        steps += 1
        n_pad = steps * tile_n
    grid = (steps,)

    ids_flat = quant_ids.reshape(-1).astype(jnp.int32)
    ids_flat = jnp.pad(ids_flat, (0, n_pad - n))
    ids2d = ids_flat.reshape(n_pad, 1)

    out_shape = jax.ShapeDtypeStruct((n_pad, fused_dim), jnp.float32)

    in_specs = [
        pl.BlockSpec((tile_n, 1), lambda i: (i, 0)),            # ids (tiled)
        pl.BlockSpec(fused_table.shape, lambda i: (0, 0)),      # table (resident)
    ]
    out_specs = pl.BlockSpec((tile_n, fused_dim), lambda i: (i, 0))

    fused_out = pl.pallas_call(
        _stat_model_kernel,
        out_shape=out_shape,
        grid_spec=pltpu.PrefetchScalarGridSpec(
            num_scalar_prefetch=0,
            grid=grid,
            in_specs=in_specs,
            out_specs=out_specs,
        ),
        compiler_params=pltpu.CompilerParams(
            dimension_semantics=("parallel",)),
    )(ids2d, fused_table)

    def unflat(a):
        return a[:n].reshape(orig_shape + (a.shape[-1],))

    fused_out = unflat(fused_out)                    # (..., 2*6D)
    x = fused_out[..., :emb_dim]
    act = fused_out[..., emb_dim:]

    return {
        'quant_embedding': x,
        'quant_scale': act[..., 0 * d:1 * d],
        'dead_zone':   act[..., 1 * d:2 * d],
        'r_hard':      act[..., 5 * d:6 * d],
        'theta_hard':  act[..., 4 * d:5 * d],
        'r_soft':      act[..., 3 * d:4 * d],
        'theta_soft':  act[..., 2 * d:3 * d],
    }


def statistical_model_reference(quant_ids, emb_weight, latent_dim):
    """Pure-JAX reference mirroring the PyTorch forward."""
    x = emb_weight[quant_ids]
    d = latent_dim
    return {
        'quant_embedding': x,
        'quant_scale': jax.nn.softplus(x[..., 0 * d:1 * d]),
        'dead_zone': jax.nn.softplus(x[..., 1 * d:2 * d]),
        'r_hard': jax.nn.sigmoid(x[..., 5 * d:6 * d]),
        'theta_hard': jax.nn.sigmoid(x[..., 4 * d:5 * d]),
        'r_soft': jax.nn.sigmoid(x[..., 3 * d:4 * d]),
        'theta_soft': jax.nn.sigmoid(x[..., 2 * d:3 * d]),
    }


if __name__ == "__main__":
    quant_levels = 16
    latent_dim = 32
    batch, seq = 2, 8

    key = jax.random.PRNGKey(0)
    k_ids, k_w = jax.random.split(key)

    quant_ids = jax.random.randint(k_ids, (batch, seq), 0, quant_levels,
                                   dtype=jnp.int32)
    # NOTE: the PyTorch module zero-inits the embedding; we use small
    # deterministic random weights so the gather/activations are exercised.
    emb_weight = 0.5 * jax.random.normal(
        k_w, (quant_levels, 6 * latent_dim), dtype=jnp.float32)

    out = statistical_model_forward(quant_ids, emb_weight,
                                    latent_dim=latent_dim)
    out = jax.block_until_ready(out)

    ref = statistical_model_reference(quant_ids, emb_weight, latent_dim)
    for name in ref:
        np.testing.assert_allclose(np.asarray(out[name]),
                                   np.asarray(ref[name]),
                                   rtol=1e-5, atol=1e-5)
        assert out[name].shape == ref[name].shape

    print("KERNEL_OK")
</pallas_src>

<mosaic_0001>
module attributes {stable_mosaic.version = 11 : i64} {
  func.func @_stat_model_kernel(%arg0: i32, %arg1: memref<16x1xi32, #tpu.memory_space<vmem>>, %arg2: memref<16x384xf32, #tpu.memory_space<vmem>>, %arg3: memref<16x384xf32, #tpu.memory_space<vmem>>) attributes {dimension_semantics = [#tpu.dimension_semantics<parallel>], iteration_bounds = array<i64: 1>, scalar_prefetch = 0 : i64, scratch_operands = 0 : i64, tpu.core_type = #tpu.core_type<tc>, window_params = [{transform_indices = @transform_0, window_bounds = array<i64: 16, 1>}, {pipeline_mode = #tpu.pipeline_mode<synchronous>, transform_indices = @transform_1, window_bounds = array<i64: 16, 384>}, {transform_indices = @transform_2, window_bounds = array<i64: 16, 384>}]} {
    %c0 = arith.constant 0 : index
    %c0_0 = arith.constant 0 : index
    %0 = vector.load %arg1[%c0, %c0_0] : memref<16x1xi32, #tpu.memory_space<vmem>>, vector<16x1xi32>
    %1 = tpu.iota {dimensions = array<i32: 1>} : vector<16x16xi32>
    %2 = vector.broadcast %0 : vector<16x1xi32> to vector<16x16xi32>
    %3 = arith.cmpi eq, %2, %1 : vector<16x16xi32>
    %4 = arith.extui %3 : vector<16x16xi1> to vector<16x16xi32>
    %5 = arith.sitofp %4 : vector<16x16xi32> to vector<16x16xf32>
    %c0_1 = arith.constant 0 : index
    %c0_2 = arith.constant 0 : index
    %6 = vector.load %arg2[%c0_1, %c0_2] : memref<16x384xf32, #tpu.memory_space<vmem>>, vector<16x384xf32>
    %cst = arith.constant dense<0.000000e+00> : vector<16x384xf32>
    %7 = tpu.matmul %5, %6, %cst {dimension_numbers = #tpu.dot_dimension_numbers<[1], [0], [0], [1], [0, 0, 1, 1], [], []>} : vector<16x16xf32>, vector<16x384xf32>, vector<16x384xf32> -> vector<16x384xf32>
    %c0_3 = arith.constant 0 : index
    %c0_4 = arith.constant 0 : index
    %8 = vector.load %arg3[%c0_3, %c0_4] : memref<16x384xf32, #tpu.memory_space<vmem>>, vector<16x384xf32>
    tpu.vector_store %arg3[%c0_3, %c0_4], %7 {strides = array<i32>} : memref<16x384xf32, #tpu.memory_space<vmem>>, vector<16x384xf32>,
    return
  }
  func.func @transform_0(%arg0: i32) -> (i32, i32) {
    %c0_i32 = arith.constant 0 : i32
    %c0_i32_0 = arith.constant 0 : i32
    return %arg0, %c0_i32 : i32, i32
  }
  func.func @transform_1(%arg0: i32) -> (i32, i32) {
    %c0_i32 = arith.constant 0 : i32
    %c0_i32_0 = arith.constant 0 : i32
    %c0_i32_1 = arith.constant 0 : i32
    return %c0_i32, %c0_i32_0 : i32, i32
  }
  func.func @transform_2(%arg0: i32) -> (i32, i32) {
    %c0_i32 = arith.constant 0 : i32
    %c0_i32_0 = arith.constant 0 : i32
    return %arg0, %c0_i32 : i32, i32
  }
}

</mosaic_0001>

<llo_original>
// kernel: statistical_model_forward.1
$region0: #{statistical_model_forward.1}
  #allocation0 [shape = 'u32[]', space=smem, size = 0x4, offset = 0x4, fixed_abs, tag = 'smem constant byte address 0x4 - core index']
  #allocation1 [shape = 'u32[144,128]{1,0:T(1,128)}', space=vmem, size = 0x12000, scoped, tag = 'internal scratch']
  %s0 = inlined_call_operand.vmem [shape: s32[16,1], index: 0, kind: input, shape index: {}]
  %s1 = inlined_call_operand.vmem [shape: f32[16,384], index: 1, kind: input, shape index: {}]
  %s2 = inlined_call_operand.vmem [shape: f32[16,384], index: 2, kind: output, shape index: {}]
  %s3 = sld [smem:[#allocation0]]
  $region18: #{statistical_model_forward.1} parent=0
    _
  %s5 = ssub.s32 1, %s3
  %s6 = scalar_select 0, %s5, %s3
  // Predicated region
  $region2: #{statistical_model_forward.1} parent=0 // pred_check
    _
  $region3: #{statistical_model_forward.1} parent=0 // pred_check_branch
    %8 = sbr.rel (0) target = $region5
  $region4: #{statistical_model_forward.1} parent=0 // pred_region
    _
  $region5: #{statistical_model_forward.1} parent=0 // pred_fallthru
    _
  // Predicated region
  $region6: #{statistical_model_forward.1} parent=0 // pred_check
    _
  $region7: #{statistical_model_forward.1} parent=0 // pred_check_branch
    %10 = sbr.rel (0) target = $region9
  $region8: #{statistical_model_forward.1} parent=0 // pred_region
    _
  $region9: #{statistical_model_forward.1} parent=0 // pred_fallthru
    _
  %v11 = vld [vmem:[%s0] sm:$0xff]
  %v12 = vld [vmem:[%s0 + $0x8] sm:$0xff]
  %v13 = vlaneseq
  %v14 = vand.u32 %v13, 127
  %15 = vset.pattern.permute.xlu0 0
  %16 = vperm.xlu0 %15, %v11
  %v17 = vpop.permute.xlu0 %16
  %18 = vset.pattern.permute.xlu0 0
  %19 = vperm.xlu0 %18, %v12
  %v20 = vpop.permute.xlu0 %19
  %vm21 = vcmp.eq.s32.totalorder %v17, %v14
  %vm22 = vcmp.eq.s32.totalorder %v20, %v14
  %v23 = vsel %vm21, 1, 0
  %v24 = vsel %vm22, 1, 0
  %v25 = vcvt.s32.f32 %v23
  %v26 = vcvt.s32.f32 %v24
  %v27 = vld [vmem:[%s1] sm:$0xff]
  %v28 = vld [vmem:[%s1 + $0x8] sm:$0xff]
  %v29 = vld [vmem:[%s1 + $0x10] sm:$0xff]
  %v30 = vld [vmem:[%s1 + $0x18] sm:$0xff]
  %v31 = vld [vmem:[%s1 + $0x20] sm:$0xff]
  %v32 = vld [vmem:[%s1 + $0x28] sm:$0xff]
  %vm33 = vcmask 130048
  %v35 = vsel %vm33, %v25, 0
  %v38 = vsel %vm33, %v26, 0
  %40 = vmatprep.subr.mxu0 %v28
  %41 = vmatpush1.msra.mxu0 %v27
  %42 = vmatprep.subr.mxu0 %v31
  %43 = vmatpush1.msra.mxu0 %v30
  %44 = vmatprep.subr.mxu0 0.0
  %45 = vmatpush1.msra.mxu0 0.0
  %46 = vmatprep.subr.mxu0 0.0
  %47 = vmatpush1.msra.mxu0 0.0
  %48 = vmatprep.subr.mxu0 0.0
  %49 = vmatpush1.msra.mxu0 0.0
  %50 = vmatprep.subr.mxu0 0.0
  %51 = vmatpush1.msra.mxu0 0.0
  %52 = vmatprep.subr.mxu0 0.0
  %53 = vmatpush1.msra.mxu0 0.0
  %54 = vmatprep.subr.mxu0 0.0
  %55 = vmatpush1.msra.mxu0 0.0
  %56 = vmatprep.subr.mxu0 0.0
  %57 = vmatpush1.msra.mxu0 0.0
  %58 = vmatprep.subr.mxu0 0.0
  %59 = vmatpush1.msra.mxu0 0.0
  %60 = vmatprep.subr.mxu0 0.0
  %61 = vmatpush1.msra.mxu0 0.0
  %62 = vmatprep.subr.mxu0 0.0
  %63 = vmatpush1.msra.mxu0 0.0
  %64 = vmatprep.subr.mxu0 0.0
  %65 = vmatpush1.msra.mxu0 0.0
  %66 = vmatprep.subr.mxu0 0.0
  %67 = vmatpush1.msra.mxu0 0.0
  %68 = vmatprep.subr.mxu0 0.0
  %69 = vmatpush1.msra.mxu0 0.0
  %70 = vmatprep.subr.mxu0 0.0
  %71 = vmatpush1.msra.mxu0 0.0
  %72 = vmatprep.subr.mxu0 0.0
  %73 = vmatpush1.msra.mxu0 0.0
  %74 = vmatprep.subr.mxu0 0.0
  %75 = vmatpush1.msra.mxu0 0.0
  %76 = vmatprep.subr.mxu0 0.0
  %77 = vmatpush1.msra.mxu0 0.0
  %78 = vmatprep.subr.mxu0 0.0
  %79 = vmatpush1.msra.mxu0 0.0
  %80 = vmatprep.subr.mxu0 0.0
  %81 = vmatpush1.msra.mxu0 0.0
  %82 = vmatprep.subr.mxu0 0.0
  %83 = vmatpush1.msra.mxu0 0.0
  %84 = vmatprep.subr.mxu0 0.0
  %85 = vmatpush1.msra.mxu0 0.0
  %86 = vmatprep.subr.mxu0 0.0
  %87 = vmatpush1.msra.mxu0 0.0
  %88 = vmatprep.subr.mxu0 0.0
  %89 = vmatpush1.msra.mxu0 0.0
  %90 = vmatprep.subr.mxu0 0.0
  %91 = vmatpush1.msra.mxu0 0.0
  %92 = vmatprep.subr.mxu0 0.0
  %93 = vmatpush1.msra.mxu0 0.0
  %94 = vmatprep.subr.mxu0 0.0
  %95 = vmatpush1.msra.mxu0 0.0
  %96 = vmatprep.subr.mxu0 0.0
  %97 = vmatpush1.msra.mxu0 0.0
  %98 = vmatprep.subr.mxu0 0.0
  %99 = vmatpush1.msra.mxu0 0.0
  %100 = vmatprep.subr.mxu0 0.0
  %101 = vmatpush1.msra.mxu0 0.0
  %102 = vmatprep.subr.mxu0 0.0
  %103 = vmatpush1.msra.mxu0 0.0
  %104 = vmatprep.mubr.f32.mxu0 0.0
  %105 = vmatmul.mubr.f32.gmra.mrb[0].mxu0 %v35
  %v106 = vpop.f32.mrb[0].mxu0
  %v107 = vadd.f32 0.0, %v106
  %v108 = vpop.f32.mrb[0].mxu0
  %v109 = vadd.f32 0.0, %v108
  %110 = vmatprep.mubr.f32.mxu0 0.0
  %111 = vmatmul.mubr.f32.gmra.mrb[0].mxu0 %v38
  %v112 = vpop.f32.mrb[0].mxu0
  %v113 = vadd.f32 0.0, %v112
  %v114 = vpop.f32.mrb[0].mxu0
  %v115 = vadd.f32 0.0, %v114
  %116 = vdwg.mxu0
  %117 = vmatprep.subr.mxu0 0.0
  %118 = vmatpush1.msra.mxu0 %v29
  %119 = vmatprep.subr.mxu0 0.0
  %120 = vmatpush1.msra.mxu0 %v32
  %121 = vmatprep.subr.mxu0 0.0
  %122 = vmatpush1.msra.mxu0 0.0
  %123 = vmatprep.subr.mxu0 0.0
  %124 = vmatpush1.msra.mxu0 0.0
  %125 = vmatprep.subr.mxu0 0.0
  %126 = vmatpush1.msra.mxu0 0.0
  %127 = vmatprep.subr.mxu0 0.0
  %128 = vmatpush1.msra.mxu0 0.0
  %129 = vmatprep.subr.mxu0 0.0
  %130 = vmatpush1.msra.mxu0 0.0
  %131 = vmatprep.subr.mxu0 0.0
  %132 = vmatpush1.msra.mxu0 0.0
  %133 = vmatprep.subr.mxu0 0.0
  %134 = vmatpush1.msra.mxu0 0.0
  %135 = vmatprep.subr.mxu0 0.0
  %136 = vmatpush1.msra.mxu0 0.0
  %137 = vmatprep.subr.mxu0 0.0
  %138 = vmatpush1.msra.mxu0 0.0
  %139 = vmatprep.subr.mxu0 0.0
  %140 = vmatpush1.msra.mxu0 0.0
  %141 = vmatprep.subr.mxu0 0.0
  %142 = vmatpush1.msra.mxu0 0.0
  %143 = vmatprep.subr.mxu0 0.0
  %144 = vmatpush1.msra.mxu0 0.0
  %145 = vmatprep.subr.mxu0 0.0
  %146 = vmatpush1.msra.mxu0 0.0
  %147 = vmatprep.subr.mxu0 0.0
  %148 = vmatpush1.msra.mxu0 0.0
  %149 = vmatprep.subr.mxu0 0.0
  %150 = vmatpush1.msra.mxu0 0.0
  %151 = vmatprep.subr.mxu0 0.0
  %152 = vmatpush1.msra.mxu0 0.0
  %153 = vmatprep.subr.mxu0 0.0
  %154 = vmatpush1.msra.mxu0 0.0
  %155 = vmatprep.subr.mxu0 0.0
  %156 = vmatpush1.msra.mxu0 0.0
  %157 = vmatprep.subr.mxu0 0.0
  %158 = vmatpush1.msra.mxu0 0.0
  %159 = vmatprep.subr.mxu0 0.0
  %160 = vmatpush1.msra.mxu0 0.0
  %161 = vmatprep.subr.mxu0 0.0
  %162 = vmatpush1.msra.mxu0 0.0
  %163 = vmatprep.subr.mxu0 0.0
  %164 = vmatpush1.msra.mxu0 0.0
  %165 = vmatprep.subr.mxu0 0.0
  %166 = vmatpush1.msra.mxu0 0.0
  %167 = vmatprep.subr.mxu0 0.0
  %168 = vmatpush1.msra.mxu0 0.0
  %169 = vmatprep.subr.mxu0 0.0
  %170 = vmatpush1.msra.mxu0 0.0
  %171 = vmatprep.subr.mxu0 0.0
  %172 = vmatpush1.msra.mxu0 0.0
  %173 = vmatprep.subr.mxu0 0.0
  %174 = vmatpush1.msra.mxu0 0.0
  %175 = vmatprep.subr.mxu0 0.0
  %176 = vmatpush1.msra.mxu0 0.0
  %177 = vmatprep.subr.mxu0 0.0
  %178 = vmatpush1.msra.mxu0 0.0
  %179 = vmatprep.subr.mxu0 0.0
  %180 = vmatpush1.msra.mxu0 0.0
  %181 = vmatprep.mubr.f32.mxu0 0.0
  %182 = vmatmul.mubr.f32.gmra.mrb[0].mxu0 %v35
  %v183 = vpop.f32.mrb[0].mxu0
  %v184 = vadd.f32 0.0, %v183
  %v185 = vpop.f32.mrb[0].mxu0
  %186 = vmatprep.mubr.f32.mxu0 0.0
  %187 = vmatmul.mubr.f32.gmra.mrb[0].mxu0 %v38
  %v188 = vpop.f32.mrb[0].mxu0
  %v189 = vadd.f32 0.0, %v188
  %v190 = vpop.f32.mrb[0].mxu0
  %191 = vdwg.mxu0
  %192 = vst [vmem:[%s2] sm:$0xff] %v107
  %193 = vst [vmem:[%s2 + $0x8] sm:$0xff] %v109
  %194 = vst [vmem:[%s2 + $0x10] sm:$0xff] %v184
  %195 = vst [vmem:[%s2 + $0x18] sm:$0xff] %v113
  %196 = vst [vmem:[%s2 + $0x20] sm:$0xff] %v115
  %197 = vst [vmem:[%s2 + $0x28] sm:$0xff] %v189
  // Predicated region
  $region10: #{statistical_model_forward.1} parent=0 // pred_check
    _
  $region11: #{statistical_model_forward.1} parent=0 // pred_check_branch
    %199 = sbr.rel (0) target = $region13
  $region12: #{statistical_model_forward.1} parent=0 // pred_region
    _
  $region13: #{statistical_model_forward.1} parent=0 // pred_fallthru
    _
  // Predicated region
  $region14: #{statistical_model_forward.1} parent=0 // pred_check
    _
  $region15: #{statistical_model_forward.1} parent=0 // pred_check_branch
    %201 = sbr.rel (0) target = $region17
  $region16: #{statistical_model_forward.1} parent=0 // pred_region
    _
  $region17: #{statistical_model_forward.1} parent=0 // pred_fallthru
    _

</llo_original>
